<compile_context>
chip_gen: v5e
topology: v5e:2x2
jax: 0.10.0
libtpu: 0.0.40
codegen_flags: <defaults>
</compile_context>

<pallas_src>
import jax
import jax.numpy as jnp
from jax.experimental import pallas as pl
from jax.experimental.pallas import tpu as pltpu

TM_DEFAULT = 1024          # tokens per grid step (multiple of 128)
_SMALL_N_XLA_CUTOFF = 1024  # below this, plain XLA gather beats the kernel


def _round_up(x, m):
    return (x + m - 1) // m * m


def _gather_project_kernel(ids_ref, table_ref, out_ref):
    """One grid step: one-hot gather of TM fused-table rows via the MXU.

    ids_ref   : VMEM [TM, 1]          int32     token ids for this tile
    table_ref : VMEM [V_pad, H_pad]   bfloat16  fused table (emb @ W + b, zero-padded)
    out_ref   : VMEM [TM, H_pad]      out_dtype output tile
    """
    tm = out_ref.shape[0]
    v_pad = table_ref.shape[0]
    ids = ids_ref[...]  # [TM, 1]
    # Vectorized gather: one-hot(ids) @ table on the MXU, bf16 inputs, f32 acc.
    onehot = (
        jax.lax.broadcasted_iota(jnp.int32, (tm, v_pad), 1) == ids
    ).astype(table_ref.dtype)
    acc = jnp.dot(onehot, table_ref[...], preferred_element_type=jnp.float32)
    out_ref[...] = acc.astype(out_ref.dtype)


def qus_embedding_map(qus, emb_table, w, b, *, tm=TM_DEFAULT,
                      out_dtype=jnp.float32, use_pallas=None):
    """qus: [B, S] int -> [B, S, H].  Matches embedding(qus) @ W^T + b."""
    B, S = qus.shape
    V, E = emb_table.shape
    H = w.shape[1]
    N = B * S

    # Token ids, clamped (out-of-range ids map to a valid row instead of erroring).
    ids = jnp.clip(qus.reshape(N).astype(jnp.int32), 0, V - 1)

    # --- Fuse the Linear into the table (single V x E x H matmul in plain XLA).
    table = (
        jnp.dot(emb_table.astype(jnp.float32), w.astype(jnp.float32),
                precision=jax.lax.Precision.HIGHEST)
        + b.reshape(1, H).astype(jnp.float32)
    )  # [V, H] f32

    # --- Tiny-N early-out: fixed pallas_call + padding overhead dominates.
    if use_pallas is None:
        use_pallas = N > _SMALL_N_XLA_CUTOFF
    if not use_pallas:
        return table[ids].astype(out_dtype).reshape(B, S, H)

    # --- Pad for lane-dense layout: H -> mult of 128 (unmasked stores),
    #     V -> mult of 128 (lane-aligned contraction dim).  Table stored bf16.
    h_pad = _round_up(H, 128)
    v_pad = _round_up(V, 128)
    table_padded = (
        jnp.zeros((v_pad, h_pad), jnp.bfloat16)
        .at[:V, :H].set(table.astype(jnp.bfloat16))
    )

    # --- Token tiling: big tiles, but (a) shrink for small N, (b) keep >= 2
    #     grid steps at large N so v7x's 2 TensorCores both get work.
    tm = min(tm, _round_up(N, 128))
    if N >= 2 * 128:
        tm = min(tm, _round_up((N + 1) // 2, 128))
    tm = max(128, _round_up(tm, 128))
    n_pad = _round_up(N, tm)
    ids_padded = jnp.zeros((n_pad, 1), jnp.int32).at[:N, 0].set(ids)

    grid = (n_pad // tm,)

    # --- Explicit VMEM budget: table x1 (Buffered(1)) + 2x ids tile (lane-padded)
    #     + 2x output tile + one-hot intermediate + margin.
    out_itemsize = jnp.dtype(out_dtype).itemsize
    vmem_budget = (
        v_pad * h_pad * 2            # bf16 table, single-buffered
        + 2 * tm * 128 * 4           # ids tile (lane-padded), double-buffered
        + 2 * tm * h_pad * out_itemsize  # output tile, double-buffered
        + tm * v_pad * 2             # bf16 one-hot intermediate
        + (4 << 20)                  # scratch / regalloc headroom
    )
    vmem_limit = int(min(max(vmem_budget, 16 << 20), 100 << 20))

    cost = pl.CostEstimate(
        flops=2 * n_pad * v_pad * h_pad,
        transcendentals=0,
        bytes_accessed=(n_pad * 4                      # ids
                        + v_pad * h_pad * 2            # table (read once)
                        + n_pad * h_pad * out_itemsize),  # output
    )

    out_padded = pl.pallas_call(
        _gather_project_kernel,
        out_shape=jax.ShapeDtypeStruct((n_pad, h_pad), out_dtype),
        grid_spec=pltpu.PrefetchScalarGridSpec(
            num_scalar_prefetch=0,
            grid=grid,
            in_specs=[
                # token-id tile for this grid step
                pl.BlockSpec((tm, 1), lambda i: (i, 0)),
                # fused table, resident (constant block index) -> single buffer
                pl.BlockSpec((v_pad, h_pad), lambda i: (0, 0),
                             pipeline_mode=pl.Buffered(1)),
            ],
            out_specs=pl.BlockSpec((tm, h_pad), lambda i: (i, 0)),
        ),
        compiler_params=pltpu.CompilerParams(
            dimension_semantics=("parallel",),
            vmem_limit_bytes=vmem_limit,
        ),
        cost_estimate=cost,
    )(ids_padded, table_padded)

    return out_padded[:N, :H].reshape(B, S, H)


if __name__ == "__main__":
    # Small shapes consistent with the module's forward.
    B, S = 2, 8           # batch, sequence length
    V = 50                # word_size (vocab)
    E = 32                # embedding_dim
    H = 64                # hidden_size

    key = jax.random.PRNGKey(0)
    k_ids, k_emb, k_w, k_b = jax.random.split(key, 4)

    qus = jax.random.randint(k_ids, (B, S), 0, V, dtype=jnp.int32)
    emb_table = jax.random.normal(k_emb, (V, E), dtype=jnp.float32) * 0.1
    # PyTorch Linear stores weight as [H, E]; we use the transpose [E, H].
    w = jax.random.normal(k_w, (E, H), dtype=jnp.float32) * 0.1
    b = jax.random.normal(k_b, (H,), dtype=jnp.float32) * 0.1

    # Force the Pallas path so the kernel is exercised even at this tiny N
    # (production callers use the default auto early-out for small N).
    out = qus_embedding_map(qus, emb_table, w, b, use_pallas=True)
    out = jax.block_until_ready(out)

    # Pure-JAX reference: embedding lookup + linear (f32).
    ref = emb_table[qus] @ w + b
    assert out.shape == (B, S, H)
    # bf16 fused table -> ~1e-3 relative rounding on table rows; acc stays f32.
    assert jnp.allclose(out, ref, atol=1e-2, rtol=1e-2), (
        float(jnp.max(jnp.abs(out - ref)))
    )

    print("KERNEL_OK")
</pallas_src>

<mosaic_0001>
module attributes {stable_mosaic.version = 11 : i64} {
  func.func @_gather_project_kernel(%arg0: i32, %arg1: memref<128x1xi32, #tpu.memory_space<vmem>>, %arg2: memref<128x128xbf16, #tpu.memory_space<vmem>>, %arg3: memref<128x128xf32, #tpu.memory_space<vmem>>) attributes {dimension_semantics = [#tpu.dimension_semantics<parallel>], iteration_bounds = array<i64: 1>, scalar_prefetch = 0 : i64, scratch_operands = 0 : i64, tpu.core_type = #tpu.core_type<tc>, window_params = [{transform_indices = @transform_0, window_bounds = array<i64: 128, 1>}, {pipeline_mode = #tpu.pipeline_mode<synchronous>, transform_indices = @transform_1, window_bounds = array<i64: 128, 128>}, {transform_indices = @transform_2, window_bounds = array<i64: 128, 128>}]} {
    %c0 = arith.constant 0 : index
    %c0_0 = arith.constant 0 : index
    %0 = vector.load %arg1[%c0, %c0_0] : memref<128x1xi32, #tpu.memory_space<vmem>>, vector<128x1xi32>
    %1 = tpu.iota {dimensions = array<i32: 1>} : vector<128x128xi32>
    %2 = vector.broadcast %0 : vector<128x1xi32> to vector<128x128xi32>
    %3 = arith.cmpi eq, %1, %2 : vector<128x128xi32>
    %4 = arith.extui %3 : vector<128x128xi1> to vector<128x128xi32>
    %5 = arith.sitofp %4 : vector<128x128xi32> to vector<128x128xf32>
    %6 = arith.truncf %5 : vector<128x128xf32> to vector<128x128xbf16>
    %c0_1 = arith.constant 0 : index
    %c0_2 = arith.constant 0 : index
    %7 = vector.load %arg2[%c0_1, %c0_2] : memref<128x128xbf16, #tpu.memory_space<vmem>>, vector<128x128xbf16>
    %cst = arith.constant dense<0.000000e+00> : vector<128x128xf32>
    %8 = tpu.matmul %6, %7, %cst {dimension_numbers = #tpu.dot_dimension_numbers<[1], [0], [0], [1], [0, 0, 1, 1], [], []>} : vector<128x128xbf16>, vector<128x128xbf16>, vector<128x128xf32> -> vector<128x128xf32>
    %c0_3 = arith.constant 0 : index
    %c0_4 = arith.constant 0 : index
    %9 = vector.load %arg3[%c0_3, %c0_4] : memref<128x128xf32, #tpu.memory_space<vmem>>, vector<128x128xf32>
    tpu.vector_store %arg3[%c0_3, %c0_4], %8 {strides = array<i32>} : memref<128x128xf32, #tpu.memory_space<vmem>>, vector<128x128xf32>,
    return
  }
  func.func @transform_0(%arg0: i32) -> (i32, i32) {
    %c0_i32 = arith.constant 0 : i32
    %c0_i32_0 = arith.constant 0 : i32
    return %arg0, %c0_i32 : i32, i32
  }
  func.func @transform_1(%arg0: i32) -> (i32, i32) {
    %c0_i32 = arith.constant 0 : i32
    %c0_i32_0 = arith.constant 0 : i32
    %c0_i32_1 = arith.constant 0 : i32
    return %c0_i32, %c0_i32_0 : i32, i32
  }
  func.func @transform_2(%arg0: i32) -> (i32, i32) {
    %c0_i32 = arith.constant 0 : i32
    %c0_i32_0 = arith.constant 0 : i32
    return %arg0, %c0_i32 : i32, i32
  }
}

</mosaic_0001>

<llo_original>
// kernel: tpu_custom_call.1
$region0: #{tpu_custom_call.1}
  #allocation0 [shape = 'u32[]', space=smem, size = 0x4, offset = 0x4, fixed_abs, tag = 'smem constant byte address 0x4 - core index']
  #allocation1 [shape = 'u32[72,128]{1,0:T(1,128)}', space=vmem, size = 0x9000, scoped, tag = 'internal scratch']
  %s0 = inlined_call_operand.vmem [shape: s32[128,1], index: 0, kind: input, shape index: {}]
  %s1 = inlined_call_operand.vmem [shape: bf16[128,128], index: 1, kind: input, shape index: {}]
  %s2 = inlined_call_operand.hbm [shape: f32[128,128], index: 2, kind: output, shape index: {}]
  %s3 = sld [smem:[#allocation0]]
  $region18: #{tpu_custom_call.1} parent=0
    _
  %s5 = ssub.s32 1, %s3
  %s6 = scalar_select 0, %s5, %s3
  $region1: #{tpu_custom_call.1} parent=0
    #allocation2 [shape = 'u8[65536]{0}', space=vmem, size = 0x10000, scoped, tag = 'output window, operand 0, single buffered']
    #allocation3 [shape = 's32[1]{0}', space=sflag, size = 0x4, scoped, tag = 'scoped memory for tpu_custom_call.1']
    %7 = vsyncpa [#allocation3], 0
    // Predicated region
    $region2: #{tpu_custom_call.1} parent=1 // pred_check
      _
    $region3: #{tpu_custom_call.1} parent=1 // pred_check_branch
      %9 = sbr.rel (0) target = $region5
    $region4: #{tpu_custom_call.1} parent=1 // pred_region
      _
    $region5: #{tpu_custom_call.1} parent=1 // pred_fallthru
      _
    // Predicated region
    $region6: #{tpu_custom_call.1} parent=1 // pred_check
      _
    $region7: #{tpu_custom_call.1} parent=1 // pred_check_branch
      %11 = sbr.rel (0) target = $region9
    $region8: #{tpu_custom_call.1} parent=1 // pred_region
      _
    $region9: #{tpu_custom_call.1} parent=1 // pred_fallthru
      _
    %v12 = vld [vmem:[%s0] sm:$0xff]
    %v13 = vld [vmem:[%s0 + $0x8] sm:$0xff]
    %v14 = vld [vmem:[%s0 + $0x10] sm:$0xff]
    %v15 = vld [vmem:[%s0 + $0x18] sm:$0xff]
    %v16 = vld [vmem:[%s0 + $0x20] sm:$0xff]
    %v17 = vld [vmem:[%s0 + $0x28] sm:$0xff]
    %v18 = vld [vmem:[%s0 + $0x30] sm:$0xff]
    %v19 = vld [vmem:[%s0 + $0x38] sm:$0xff]
    %v20 = vld [vmem:[%s0 + $0x40] sm:$0xff]
    %v21 = vld [vmem:[%s0 + $0x48] sm:$0xff]
    %v22 = vld [vmem:[%s0 + $0x50] sm:$0xff]
    %v23 = vld [vmem:[%s0 + $0x58] sm:$0xff]
    %v24 = vld [vmem:[%s0 + $0x60] sm:$0xff]
    %v25 = vld [vmem:[%s0 + $0x68] sm:$0xff]
    %v26 = vld [vmem:[%s0 + $0x70] sm:$0xff]
    %v27 = vld [vmem:[%s0 + $0x78] sm:$0xff]
    %v28 = vlaneseq
    %v29 = vand.u32 %v28, 127
    %30 = vset.pattern.permute.xlu0 0
    %31 = vperm.xlu0 %30, %v12
    %v32 = vpop.permute.xlu0 %31
    %33 = vset.pattern.permute.xlu0 0
    %34 = vperm.xlu0 %33, %v13
    %v35 = vpop.permute.xlu0 %34
    %36 = vset.pattern.permute.xlu0 0
    %37 = vperm.xlu0 %36, %v14
    %v38 = vpop.permute.xlu0 %37
    %39 = vset.pattern.permute.xlu0 0
    %40 = vperm.xlu0 %39, %v15
    %v41 = vpop.permute.xlu0 %40
    %42 = vset.pattern.permute.xlu0 0
    %43 = vperm.xlu0 %42, %v16
    %v44 = vpop.permute.xlu0 %43
    %45 = vset.pattern.permute.xlu0 0
    %46 = vperm.xlu0 %45, %v17
    %v47 = vpop.permute.xlu0 %46
    %48 = vset.pattern.permute.xlu0 0
    %49 = vperm.xlu0 %48, %v18
    %v50 = vpop.permute.xlu0 %49
    %51 = vset.pattern.permute.xlu0 0
    %52 = vperm.xlu0 %51, %v19
    %v53 = vpop.permute.xlu0 %52
    %54 = vset.pattern.permute.xlu0 0
    %55 = vperm.xlu0 %54, %v20
    %v56 = vpop.permute.xlu0 %55
    %57 = vset.pattern.permute.xlu0 0
    %58 = vperm.xlu0 %57, %v21
    %v59 = vpop.permute.xlu0 %58
    %60 = vset.pattern.permute.xlu0 0
    %61 = vperm.xlu0 %60, %v22
    %v62 = vpop.permute.xlu0 %61
    %63 = vset.pattern.permute.xlu0 0
    %64 = vperm.xlu0 %63, %v23
    %v65 = vpop.permute.xlu0 %64
    %66 = vset.pattern.permute.xlu0 0
    %67 = vperm.xlu0 %66, %v24
    %v68 = vpop.permute.xlu0 %67
    %69 = vset.pattern.permute.xlu0 0
    %70 = vperm.xlu0 %69, %v25
    %v71 = vpop.permute.xlu0 %70
    %72 = vset.pattern.permute.xlu0 0
    %73 = vperm.xlu0 %72, %v26
    %v74 = vpop.permute.xlu0 %73
    %75 = vset.pattern.permute.xlu0 0
    %76 = vperm.xlu0 %75, %v27
    %v77 = vpop.permute.xlu0 %76
    %vm78 = vcmp.eq.s32.totalorder %v29, %v32
    %vm79 = vcmp.eq.s32.totalorder %v29, %v35
    %vm80 = vcmp.eq.s32.totalorder %v29, %v38
    %vm81 = vcmp.eq.s32.totalorder %v29, %v41
    %vm82 = vcmp.eq.s32.totalorder %v29, %v44
    %vm83 = vcmp.eq.s32.totalorder %v29, %v47
    %vm84 = vcmp.eq.s32.totalorder %v29, %v50
    %vm85 = vcmp.eq.s32.totalorder %v29, %v53
    %vm86 = vcmp.eq.s32.totalorder %v29, %v56
    %vm87 = vcmp.eq.s32.totalorder %v29, %v59
    %vm88 = vcmp.eq.s32.totalorder %v29, %v62
    %vm89 = vcmp.eq.s32.totalorder %v29, %v65
    %vm90 = vcmp.eq.s32.totalorder %v29, %v68
    %vm91 = vcmp.eq.s32.totalorder %v29, %v71
    %vm92 = vcmp.eq.s32.totalorder %v29, %v74
    %vm93 = vcmp.eq.s32.totalorder %v29, %v77
    %v94 = vsel %vm78, 1, 0
    %v95 = vsel %vm79, 1, 0
    %v96 = vsel %vm80, 1, 0
    %v97 = vsel %vm81, 1, 0
    %v98 = vsel %vm82, 1, 0
    %v99 = vsel %vm83, 1, 0
    %v100 = vsel %vm84, 1, 0
    %v101 = vsel %vm85, 1, 0
    %v102 = vsel %vm86, 1, 0
    %v103 = vsel %vm87, 1, 0
    %v104 = vsel %vm88, 1, 0
    %v105 = vsel %vm89, 1, 0
    %v106 = vsel %vm90, 1, 0
    %v107 = vsel %vm91, 1, 0
    %v108 = vsel %vm92, 1, 0
    %v109 = vsel %vm93, 1, 0
    %v110 = vcvt.s32.f32 %v94
    %v111 = vcvt.s32.f32 %v95
    %v112 = vcvt.s32.f32 %v96
    %v113 = vcvt.s32.f32 %v97
    %v114 = vcvt.s32.f32 %v98
    %v115 = vcvt.s32.f32 %v99
    %v116 = vcvt.s32.f32 %v100
    %v117 = vcvt.s32.f32 %v101
    %v118 = vcvt.s32.f32 %v102
    %v119 = vcvt.s32.f32 %v103
    %v120 = vcvt.s32.f32 %v104
    %v121 = vcvt.s32.f32 %v105
    %v122 = vcvt.s32.f32 %v106
    %v123 = vcvt.s32.f32 %v107
    %v124 = vcvt.s32.f32 %v108
    %v125 = vcvt.s32.f32 %v109
    %v126 = vpack.c.bf16 %v111, %v110
    %v127 = vpack.c.bf16 %v113, %v112
    %v128 = vpack.c.bf16 %v115, %v114
    %v129 = vpack.c.bf16 %v117, %v116
    %v130 = vpack.c.bf16 %v119, %v118
    %v131 = vpack.c.bf16 %v121, %v120
    %v132 = vpack.c.bf16 %v123, %v122
    %v133 = vpack.c.bf16 %v125, %v124
    %v134 = vld [vmem:[%s1] sm:$0xf]
    %v135 = vld [vmem:[%s1 + $0x4] sm:$0xf]
    %v136 = vld [vmem:[%s1 + $0x8] sm:$0xf]
    %v137 = vld [vmem:[%s1 + $0xc] sm:$0xf]
    %v138 = vld [vmem:[%s1 + $0x10] sm:$0xf]
    %v139 = vld [vmem:[%s1 + $0x14] sm:$0xf]
    %v140 = vld [vmem:[%s1 + $0x18] sm:$0xf]
    %v141 = vld [vmem:[%s1 + $0x1c] sm:$0xf]
    %v142 = vld [vmem:[%s1 + $0x20] sm:$0xf]
    %v143 = vld [vmem:[%s1 + $0x24] sm:$0xf]
    %v144 = vld [vmem:[%s1 + $0x28] sm:$0xf]
    %v145 = vld [vmem:[%s1 + $0x2c] sm:$0xf]
    %v146 = vld [vmem:[%s1 + $0x30] sm:$0xf]
    %v147 = vld [vmem:[%s1 + $0x34] sm:$0xf]
    %v148 = vld [vmem:[%s1 + $0x38] sm:$0xf]
    %v149 = vld [vmem:[%s1 + $0x3c] sm:$0xf]
    %v166 = vunpack.c.l.b16 %v134
    %v167 = vunpack.c.l.b16 %v135
    %v168 = vunpack.c.l.b16 %v136
    %v169 = vunpack.c.l.b16 %v137
    %v170 = vunpack.c.l.b16 %v138
    %v171 = vunpack.c.l.b16 %v139
    %v172 = vunpack.c.l.b16 %v140
    %v173 = vunpack.c.l.b16 %v141
    %v174 = vunpack.c.l.b16 %v142
    %v175 = vunpack.c.l.b16 %v143
    %v176 = vunpack.c.l.b16 %v144
    %v177 = vunpack.c.l.b16 %v145
    %v178 = vunpack.c.l.b16 %v146
    %v179 = vunpack.c.l.b16 %v147
    %v180 = vunpack.c.l.b16 %v148
    %v181 = vunpack.c.l.b16 %v149
    %v182 = vpack.c.b16 %v167, %v166
    %v183 = vpack.c.b16 %v169, %v168
    %v184 = vpack.c.b16 %v171, %v170
    %v185 = vpack.c.b16 %v173, %v172
    %v186 = vpack.c.b16 %v175, %v174
    %v187 = vpack.c.b16 %v177, %v176
    %v188 = vpack.c.b16 %v179, %v178
    %v189 = vpack.c.b16 %v181, %v180
    %198 = vmatpush.bf16.msra.mxu0 %v189
    %199 = vmatpush.bf16.msra.mxu0 %v188
    %200 = vmatpush.bf16.msra.mxu0 %v187
    %201 = vmatpush.bf16.msra.mxu0 %v186
    %202 = vmatpush.bf16.msra.mxu0 %v185
    %203 = vmatpush.bf16.msra.mxu0 %v184
    %204 = vmatpush.bf16.msra.mxu0 %v183
    %205 = vmatpush.bf16.msra.mxu0 %v182
    %206 = vmatmul.bf16.gmra.mxu0 %v126
    %v207 = vpop.f32.mrf.mxu0
    %v208 = vadd.f32 0.0, %v207
    %v209 = vpop.f32.mrf.mxu0
    %v210 = vadd.f32 0.0, %v209
    %211 = vmatmul.bf16.gmra.mxu0 %v127
    %v212 = vpop.f32.mrf.mxu0
    %v213 = vadd.f32 0.0, %v212
    %v214 = vpop.f32.mrf.mxu0
    %v215 = vadd.f32 0.0, %v214
    %216 = vmatmul.bf16.gmra.mxu0 %v128
    %v217 = vpop.f32.mrf.mxu0
    %v218 = vadd.f32 0.0, %v217
    %v219 = vpop.f32.mrf.mxu0
    %v220 = vadd.f32 0.0, %v219
    %221 = vmatmul.bf16.gmra.mxu0 %v129
    %v222 = vpop.f32.mrf.mxu0
    %v223 = vadd.f32 0.0, %v222
    %v224 = vpop.f32.mrf.mxu0
    %v225 = vadd.f32 0.0, %v224
    %226 = vmatmul.bf16.gmra.mxu0 %v130
    %v227 = vpop.f32.mrf.mxu0
    %v228 = vadd.f32 0.0, %v227
    %v229 = vpop.f32.mrf.mxu0
    %v230 = vadd.f32 0.0, %v229
    %231 = vmatmul.bf16.gmra.mxu0 %v131
    %v232 = vpop.f32.mrf.mxu0
    %v233 = vadd.f32 0.0, %v232
    %v234 = vpop.f32.mrf.mxu0
    %v235 = vadd.f32 0.0, %v234
    %236 = vmatmul.bf16.gmra.mxu0 %v132
    %v237 = vpop.f32.mrf.mxu0
    %v238 = vadd.f32 0.0, %v237
    %v239 = vpop.f32.mrf.mxu0
    %v240 = vadd.f32 0.0, %v239
    %241 = vmatmul.bf16.gmra.mxu0 %v133
    %v242 = vpop.f32.mrf.mxu0
    %v243 = vadd.f32 0.0, %v242
    %v244 = vpop.f32.mrf.mxu0
    %v245 = vadd.f32 0.0, %v244
    %246 = vdwg.mxu0
    %247 = vst [vmem:[#allocation2] sm:$0xff] %v208
    %248 = vst [vmem:[#allocation2 + $0x8] sm:$0xff] %v210
    %249 = vst [vmem:[#allocation2 + $0x10] sm:$0xff] %v213
    %250 = vst [vmem:[#allocation2 + $0x18] sm:$0xff] %v215
    %251 = vst [vmem:[#allocation2 + $0x20] sm:$0xff] %v218
    %252 = vst [vmem:[#allocation2 + $0x28] sm:$0xff] %v220
    %253 = vst [vmem:[#allocation2 + $0x30] sm:$0xff] %v223
    %254 = vst [vmem:[#allocation2 + $0x38] sm:$0xff] %v225
    %255 = vst [vmem:[#allocation2 + $0x40] sm:$0xff] %v228
    %256 = vst [vmem:[#allocation2 + $0x48] sm:$0xff] %v230
    %257 = vst [vmem:[#allocation2 + $0x50] sm:$0xff] %v233
    %258 = vst [vmem:[#allocation2 + $0x58] sm:$0xff] %v235
    %259 = vst [vmem:[#allocation2 + $0x60] sm:$0xff] %v238
    %260 = vst [vmem:[#allocation2 + $0x68] sm:$0xff] %v240
    %261 = vst [vmem:[#allocation2 + $0x70] sm:$0xff] %v243
    %262 = vst [vmem:[#allocation2 + $0x78] sm:$0xff] %v245
    // Predicated region
    $region10: #{tpu_custom_call.1} parent=1 // pred_check
      _
    $region11: #{tpu_custom_call.1} parent=1 // pred_check_branch
      %264 = sbr.rel (0) target = $region13
    $region12: #{tpu_custom_call.1} parent=1 // pred_region
      %266 = vsyncadd [#allocation3], 0
      %s267 = sshll.u32 [#allocation2], 4
      %s268 = int_to_ptr.vmem [resolvable:$true] %s267
      %s269 = sshll.u32 %s2, 4
      %s270 = int_to_ptr.hbm [resolvable:$true] %s269
      %275 = dma.vmem_to_hbm [thread:$0]  %s268, 2048, %s270, [#allocation3], 128, 128, 8
    $region13: #{tpu_custom_call.1} parent=1 // pred_fallthru
      _
    // Predicated region
    $region14: #{tpu_custom_call.1} parent=1 // pred_check
      _
    $region15: #{tpu_custom_call.1} parent=1 // pred_check_branch
      %277 = sbr.rel (0) target = $region17
    $region16: #{tpu_custom_call.1} parent=1 // pred_region
      %279 = dma.done [#allocation3], 2048
    $region17: #{tpu_custom_call.1} parent=1 // pred_fallthru
      _
    %280 = vsyncpa [#allocation3], 1

</llo_original>
